<compile_context>
chip_gen: v6e
topology: v6e:2x2x1
jax: 0.10.0
libtpu: 0.0.40
codegen_flags: <defaults>
</compile_context>

<pallas_src>
import functools

import jax
import jax.numpy as jnp
from jax.experimental import pallas as pl
from jax.experimental.pallas import tpu as pltpu

KSIZE = 9
STRIDE = 2
DEFAULT_LANE_TILE = 256   # fills the 256-wide MXU on v6e/v7x; harmless on v5e


def _primary_caps_kernel(w_ref, p_ref, o_ref, *, num_caps, c_out):
    # w_ref: (M, K_pad) bf16   p_ref: (K_pad, LT) bf16   o_ref: (M, LT) f32
    # with M = num_caps * C_out and LT lanes of flattened (batch*position).
    # Bias is folded into the matmul (ones row in p / bias column in w).
    u = jax.lax.dot_general(
        w_ref[...], p_ref[...],
        dimension_numbers=(((1,), (0,)), ((), ())),
        preferred_element_type=jnp.float32)          # one fused MXU matmul, f32 acc

    # Pass 1: stage raw u into o_ref (bounds vreg live range) while summing the
    # squared norm over the capsule axis — full-width VPU work on sublane slices.
    sq = None
    for cap in range(num_caps):
        s = u[cap * c_out:(cap + 1) * c_out, :]      # (C_out, LT)
        o_ref[cap * c_out:(cap + 1) * c_out, :] = s
        sq = s * s if sq is None else sq + s * s

    # squash scale = sqrt(sq)/(1+sq) == sq * rsqrt(sq*(1+sq)^2): single EUP op.
    denom = 1.0 + sq
    scale = sq * jax.lax.rsqrt(sq * denom * denom)   # (C_out, LT) f32

    # Pass 2: rescale the staged u in place — lane-dense (8,128)-aligned stores.
    for cap in range(num_caps):
        o_ref[cap * c_out:(cap + 1) * c_out, :] = (
            o_ref[cap * c_out:(cap + 1) * c_out, :] * scale)


def _im2col_bf16(x, ksize=KSIZE, stride=STRIDE):
    """Patches in (K, L) orientation, bf16; K ordered (ci, kh, kw), L = B*Ho*Wo."""
    B, C, H, W = x.shape
    Ho = (H - ksize) // stride + 1
    Wo = (W - ksize) // stride + 1
    xb = x.astype(jnp.bfloat16)                      # cast once, before 81x expansion
    cols = []
    for kh in range(ksize):
        for kw in range(ksize):
            cols.append(xb[:, :, kh:kh + stride * Ho:stride, kw:kw + stride * Wo:stride])
    p = jnp.stack(cols, axis=2)                      # (B, C, k*k, Ho, Wo)
    p = p.transpose(1, 2, 0, 3, 4)                   # (C, k*k, B, Ho, Wo)
    p = p.reshape(C * ksize * ksize, B * Ho * Wo)    # K-index = ci*81 + kh*9 + kw
    return p, Ho, Wo


def primary_caps_forward(x, weights, bias, *, lane_tile=DEFAULT_LANE_TILE):
    # x: (B, C_in, H, W) f32
    # weights: (num_caps, C_out, C_in, 9, 9) f32, bias: (num_caps, C_out) f32
    B, C_in, H, W = x.shape
    num_caps, C_out = bias.shape
    M = num_caps * C_out
    K = C_in * KSIZE * KSIZE

    patches, Ho, Wo = _im2col_bf16(x)                # (K, L) bf16
    Np = Ho * Wo
    L = B * Np                                       # flattened batch*position lanes

    # Keep >= 2 lane tiles when possible so both v7x TensorCores get work,
    # while defaulting to 256-wide tiles that feed the 256-wide MXU.
    n128 = pl.cdiv(L, 128)
    if n128 >= 2:
        lane_tile = max(128, min(lane_tile, 128 * (n128 // 2)))
    else:
        lane_tile = 128
    L_pad = pl.cdiv(L, lane_tile) * lane_tile

    # Bias folded into the matmul: ones row in patches, bias column in weights.
    K_pad = pl.cdiv(K + 1, 16) * 16                  # bf16 sublane-pair aligned only

    p2 = jnp.pad(patches, ((0, 0), (0, L_pad - L)))
    p2 = jnp.concatenate([p2, jnp.ones((1, L_pad), jnp.bfloat16)], axis=0)
    p2 = jnp.pad(p2, ((0, K_pad - (K + 1)), (0, 0)))               # (K_pad, L_pad)

    w2 = jnp.concatenate(
        [weights.reshape(M, K), bias.reshape(M, 1)], axis=1).astype(jnp.bfloat16)
    w2 = jnp.pad(w2, ((0, 0), (0, K_pad - (K + 1))))               # (M, K_pad)

    kernel = functools.partial(_primary_caps_kernel, num_caps=num_caps, c_out=C_out)

    # Explicit VMEM budget: resident weights + double-buffered patch/out tiles.
    w_bytes = M * K_pad * 2
    p_bytes = K_pad * lane_tile * 2
    o_bytes = M * lane_tile * 4
    vmem_limit = int(min(2 * (w_bytes + p_bytes + o_bytes) + (4 << 20), 48 << 20))

    cost = pl.CostEstimate(
        flops=2 * M * K_pad * L_pad,
        transcendentals=C_out * L_pad,
        bytes_accessed=M * K_pad * 2 + K_pad * L_pad * 2 + M * L_pad * 4)

    out2 = pl.pallas_call(
        kernel,
        out_shape=jax.ShapeDtypeStruct((M, L_pad), jnp.float32),
        grid_spec=pltpu.PrefetchScalarGridSpec(
            num_scalar_prefetch=0,
            grid=(L_pad // lane_tile,),
            in_specs=[
                pl.BlockSpec((M, K_pad), lambda i: (0, 0)),          # weights+bias (resident)
                pl.BlockSpec((K_pad, lane_tile), lambda i: (0, i)),  # patch lane tile
            ],
            out_specs=pl.BlockSpec((M, lane_tile), lambda i: (0, i)),
        ),
        compiler_params=pltpu.CompilerParams(
            dimension_semantics=("parallel",),       # lane tiles shard across TCs
            vmem_limit_bytes=vmem_limit),
        cost_estimate=cost,
    )(w2, p2)

    # Drop lane padding and restore the PyTorch layout (B, C_out*Np, num_caps)
    # with n = co*Np + (ho*Wo + wo) — tiny plain-XLA glue.
    out2 = out2[:, :L]
    return (out2.reshape(num_caps, C_out, B, Np)
                .transpose(2, 1, 3, 0)
                .reshape(B, C_out * Np, num_caps))


def _reference(x, weights, bias):
    # pure-JAX (f32) reference replicating the PyTorch forward exactly
    B = x.shape[0]
    num_caps = weights.shape[0]
    us = []
    for cap in range(num_caps):
        o = jax.lax.conv_general_dilated(
            x, weights[cap], window_strides=(STRIDE, STRIDE), padding="VALID",
            dimension_numbers=("NCHW", "OIHW", "NCHW"))
        o = o + bias[cap][None, :, None, None]
        us.append(o.reshape(B, -1, 1))
    u = jnp.concatenate(us, axis=-1)
    sq = jnp.sum(u * u, axis=-1, keepdims=True)
    return sq * u / ((1.0 + sq) * jnp.sqrt(sq))


if __name__ == "__main__":
    # small shapes consistent with the module: Conv2d(C_in->C_out, k=9, s=2)
    B, C_in, H, W = 4, 8, 21, 21          # -> Ho = Wo = 7, Np = 49, B*Np = 196
    num_caps, C_out = 4, 8                # -> M = 32, output N = 392

    key = jax.random.PRNGKey(0)
    kx, kw, kb = jax.random.split(key, 3)
    x = jax.random.normal(kx, (B, C_in, H, W), dtype=jnp.float32)
    weights = 0.05 * jax.random.normal(
        kw, (num_caps, C_out, C_in, KSIZE, KSIZE), dtype=jnp.float32)
    bias = 0.05 * jax.random.normal(kb, (num_caps, C_out), dtype=jnp.float32)

    fwd = jax.jit(primary_caps_forward)   # fuse the im2col/pad/cast producer chain
    out = fwd(x, weights, bias)
    out = jax.block_until_ready(out)

    ref = _reference(x, weights, bias)
    assert out.shape == ref.shape == (B, C_out * 7 * 7, num_caps)
    max_err = float(jnp.max(jnp.abs(out - ref)))
    # bf16 MXU operands: tolerance loosened vs. the f32-operand version.
    assert jnp.allclose(out, ref, atol=3e-2, rtol=3e-2), f"max err {max_err}"
    print("KERNEL_OK")
</pallas_src>

<mosaic_0001>
module attributes {stable_mosaic.version = 11 : i64} {
  func.func @_primary_caps_kernel(%arg0: i32, %arg1: memref<32x656xbf16, #tpu.memory_space<vmem>>, %arg2: memref<656x128xbf16, #tpu.memory_space<vmem>>, %arg3: memref<32x128xf32, #tpu.memory_space<vmem>>) attributes {dimension_semantics = [#tpu.dimension_semantics<parallel>], iteration_bounds = array<i64: 2>, scalar_prefetch = 0 : i64, scratch_operands = 0 : i64, tpu.core_type = #tpu.core_type<tc>, window_params = [{pipeline_mode = #tpu.pipeline_mode<synchronous>, transform_indices = @transform_0, window_bounds = array<i64: 32, 656>}, {transform_indices = @transform_1, window_bounds = array<i64: 656, 128>}, {transform_indices = @transform_2, window_bounds = array<i64: 32, 128>}]} {
    %c0 = arith.constant 0 : index
    %c0_0 = arith.constant 0 : index
    %0 = vector.load %arg1[%c0, %c0_0] : memref<32x656xbf16, #tpu.memory_space<vmem>>, vector<32x656xbf16>
    %c0_1 = arith.constant 0 : index
    %c0_2 = arith.constant 0 : index
    %1 = vector.load %arg2[%c0_1, %c0_2] : memref<656x128xbf16, #tpu.memory_space<vmem>>, vector<656x128xbf16>
    %cst = arith.constant dense<0.000000e+00> : vector<32x128xf32>
    %2 = tpu.matmul %0, %1, %cst {dimension_numbers = #tpu.dot_dimension_numbers<[1], [0], [0], [1], [0, 0, 1, 1], [], []>} : vector<32x656xbf16>, vector<656x128xbf16>, vector<32x128xf32> -> vector<32x128xf32>
    %3 = vector.extract_strided_slice %2 {offsets = [0, 0], sizes = [8, 128], strides = [1, 1]} : vector<32x128xf32> to vector<8x128xf32>
    %c0_3 = arith.constant 0 : index
    %c0_4 = arith.constant 0 : index
    %4 = vector.load %arg3[%c0_3, %c0_4] : memref<32x128xf32, #tpu.memory_space<vmem>>, vector<8x128xf32>
    tpu.vector_store %arg3[%c0_3, %c0_4], %3 {strides = array<i32>} : memref<32x128xf32, #tpu.memory_space<vmem>>, vector<8x128xf32>,
    %5 = arith.mulf %3, %3 : vector<8x128xf32>
    %6 = vector.extract_strided_slice %2 {offsets = [8, 0], sizes = [8, 128], strides = [1, 1]} : vector<32x128xf32> to vector<8x128xf32>
    %c8 = arith.constant 8 : index
    %c0_5 = arith.constant 0 : index
    %7 = vector.load %arg3[%c8, %c0_5] : memref<32x128xf32, #tpu.memory_space<vmem>>, vector<8x128xf32>
    tpu.vector_store %arg3[%c8, %c0_5], %6 {strides = array<i32>} : memref<32x128xf32, #tpu.memory_space<vmem>>, vector<8x128xf32>,
    %8 = arith.mulf %6, %6 : vector<8x128xf32>
    %9 = arith.addf %5, %8 : vector<8x128xf32>
    %10 = vector.extract_strided_slice %2 {offsets = [16, 0], sizes = [8, 128], strides = [1, 1]} : vector<32x128xf32> to vector<8x128xf32>
    %c16 = arith.constant 16 : index
    %c0_6 = arith.constant 0 : index
    %11 = vector.load %arg3[%c16, %c0_6] : memref<32x128xf32, #tpu.memory_space<vmem>>, vector<8x128xf32>
    tpu.vector_store %arg3[%c16, %c0_6], %10 {strides = array<i32>} : memref<32x128xf32, #tpu.memory_space<vmem>>, vector<8x128xf32>,
    %12 = arith.mulf %10, %10 : vector<8x128xf32>
    %13 = arith.addf %9, %12 : vector<8x128xf32>
    %14 = vector.extract_strided_slice %2 {offsets = [24, 0], sizes = [8, 128], strides = [1, 1]} : vector<32x128xf32> to vector<8x128xf32>
    %c24 = arith.constant 24 : index
    %c0_7 = arith.constant 0 : index
    %15 = vector.load %arg3[%c24, %c0_7] : memref<32x128xf32, #tpu.memory_space<vmem>>, vector<8x128xf32>
    tpu.vector_store %arg3[%c24, %c0_7], %14 {strides = array<i32>} : memref<32x128xf32, #tpu.memory_space<vmem>>, vector<8x128xf32>,
    %16 = arith.mulf %14, %14 : vector<8x128xf32>
    %17 = arith.addf %13, %16 : vector<8x128xf32>
    %cst_8 = arith.constant 1.000000e+00 : f32
    %18 = vector.broadcast %cst_8 : f32 to vector<8x128xf32>
    %19 = arith.addf %18, %17 : vector<8x128xf32>
    %20 = arith.mulf %17, %19 : vector<8x128xf32>
    %21 = arith.mulf %20, %19 : vector<8x128xf32>
    %22 = math.rsqrt %21 : vector<8x128xf32>
    %23 = arith.mulf %17, %22 : vector<8x128xf32>
    %c0_9 = arith.constant 0 : index
    %c0_10 = arith.constant 0 : index
    %24 = vector.load %arg3[%c0_9, %c0_10] : memref<32x128xf32, #tpu.memory_space<vmem>>, vector<8x128xf32>
    %25 = arith.mulf %24, %23 : vector<8x128xf32>
    %c0_11 = arith.constant 0 : index
    %c0_12 = arith.constant 0 : index
    %26 = vector.load %arg3[%c0_11, %c0_12] : memref<32x128xf32, #tpu.memory_space<vmem>>, vector<8x128xf32>
    tpu.vector_store %arg3[%c0_11, %c0_12], %25 {strides = array<i32>} : memref<32x128xf32, #tpu.memory_space<vmem>>, vector<8x128xf32>,
    %c8_13 = arith.constant 8 : index
    %c0_14 = arith.constant 0 : index
    %27 = vector.load %arg3[%c8_13, %c0_14] : memref<32x128xf32, #tpu.memory_space<vmem>>, vector<8x128xf32>
    %28 = arith.mulf %27, %23 : vector<8x128xf32>
    %c8_15 = arith.constant 8 : index
    %c0_16 = arith.constant 0 : index
    %29 = vector.load %arg3[%c8_15, %c0_16] : memref<32x128xf32, #tpu.memory_space<vmem>>, vector<8x128xf32>
    tpu.vector_store %arg3[%c8_15, %c0_16], %28 {strides = array<i32>} : memref<32x128xf32, #tpu.memory_space<vmem>>, vector<8x128xf32>,
    %c16_17 = arith.constant 16 : index
    %c0_18 = arith.constant 0 : index
    %30 = vector.load %arg3[%c16_17, %c0_18] : memref<32x128xf32, #tpu.memory_space<vmem>>, vector<8x128xf32>
    %31 = arith.mulf %30, %23 : vector<8x128xf32>
    %c16_19 = arith.constant 16 : index
    %c0_20 = arith.constant 0 : index
    %32 = vector.load %arg3[%c16_19, %c0_20] : memref<32x128xf32, #tpu.memory_space<vmem>>, vector<8x128xf32>
    tpu.vector_store %arg3[%c16_19, %c0_20], %31 {strides = array<i32>} : memref<32x128xf32, #tpu.memory_space<vmem>>, vector<8x128xf32>,
    %c24_21 = arith.constant 24 : index
    %c0_22 = arith.constant 0 : index
    %33 = vector.load %arg3[%c24_21, %c0_22] : memref<32x128xf32, #tpu.memory_space<vmem>>, vector<8x128xf32>
    %34 = arith.mulf %33, %23 : vector<8x128xf32>
    %c24_23 = arith.constant 24 : index
    %c0_24 = arith.constant 0 : index
    %35 = vector.load %arg3[%c24_23, %c0_24] : memref<32x128xf32, #tpu.memory_space<vmem>>, vector<8x128xf32>
    tpu.vector_store %arg3[%c24_23, %c0_24], %34 {strides = array<i32>} : memref<32x128xf32, #tpu.memory_space<vmem>>, vector<8x128xf32>,
    return
  }
  func.func @transform_0(%arg0: i32) -> (i32, i32) {
    %c0_i32 = arith.constant 0 : i32
    %c0_i32_0 = arith.constant 0 : i32
    %c0_i32_1 = arith.constant 0 : i32
    return %c0_i32, %c0_i32_0 : i32, i32
  }
  func.func @transform_1(%arg0: i32) -> (i32, i32) {
    %c0_i32 = arith.constant 0 : i32
    %c0_i32_0 = arith.constant 0 : i32
    return %c0_i32, %arg0 : i32, i32
  }
  func.func @transform_2(%arg0: i32) -> (i32, i32) {
    %c0_i32 = arith.constant 0 : i32
    %c0_i32_0 = arith.constant 0 : i32
    return %c0_i32, %arg0 : i32, i32
  }
}

</mosaic_0001>

<llo_original>
// kernel: primary_caps_forward.1
$region0: #{primary_caps_forward.1}
  #allocation0 [shape = 'u32[]', space=smem, size = 0x4, offset = 0x4, fixed_abs, tag = 'smem constant byte address 0x4 - core index']
  #allocation1 [shape = 'u32[144,128]{1,0:T(1,128)}', space=vmem, size = 0x12000, scoped, tag = 'internal scratch']
  %s0 = inlined_call_operand.vmem [shape: bf16[32,656], index: 0, kind: input, shape index: {}]
  %s1 = inlined_call_operand.vmem [shape: bf16[656,256], index: 1, kind: input, shape index: {}]
  %s2 = inlined_call_operand.vmem [shape: f32[32,256], index: 2, kind: output, shape index: {}]
  %s3 = sld [smem:[#allocation0]]
  $region116: #{primary_caps_forward.1} parent=0
    _
  %s5 = ssub.s32 1, %s3
  %s6 = scalar_select 0, %s5, %s3
  $region1: #{primary_caps_forward.1} parent=0
    #allocation2 [shape = 'u8[335872]{0}', space=vmem, size = 0x52000, scoped, tag = 'input window, operand 1']
    #allocation3 [shape = 'u8[32768]{0}', space=vmem, size = 0x8000, scoped, tag = 'output window, operand 0']
    loop: start=0, step=1, limit=4
    $region2: #{primary_caps_forward.1} parent=1 // loop_pre_header
      _
    $region3: #{primary_caps_forward.1} parent=1 // loop_header
      %s8 = sphi 0, %s12
      %p9 = scmp.ge.s32.totalorder %s8, 4
      %s16 = sphi 0, %s16
      %s18 = sphi 0, %s16
      %s19 = sphi 0, %s18
      %s33 = sphi 0, %s19
      %s39 = sphi 0, %s41
      %s42 = sphi 0, %s39
      %s43 = sphi 0, %s42
      %s59 = sphi 0, %s43
      %s65 = sphi 0, %s67
      %s68 = sphi 0, %s65
      %s69 = sphi 0, %s68
      %s85 = sphi 0, %s69
    $region4: #{primary_caps_forward.1} parent=1 // loop_header_branch
      %11 = sbr.rel (%p9) target = $region8
    $region5: #{primary_caps_forward.1} parent=1 // loop_body
      %s13 = ssub.s32 %s8, 1
      %s14 = ssub.s32 %s8, 2
      %s15 = sadd.s32 %s8, 1
      %s17 = sadd.s32 %s16, 1
      %p20 = scmp.eq.s32.totalorder %s8, 1
      %p21 = scmp.ne.s32.totalorder %s16, %s18
      %p22 = scmp.eq.s32.totalorder %s8, 0
      %p23 = por %p21, %p22
      %p24 = scmp.ne.s32.totalorder %s16, %s18
      %p25 = scmp.eq.s32.totalorder %s13, 1
      %p26 = por %p24, %p25
      %p27 = scmp.ne.s32.totalorder %s18, %s19
      %p28 = scmp.eq.s32.totalorder %s13, 0
      %p29 = por %p27, %p28
      %p30 = scmp.ne.s32.totalorder %s18, %s19
      %p31 = scmp.eq.s32.totalorder %s14, 1
      %p32 = por %p30, %p31
      %p34 = scmp.ne.s32.totalorder %s19, %s33
      %p35 = scmp.eq.s32.totalorder %s14, 0
      %p36 = por %p34, %p35
      %s37 = ssub.s32 %s8, %s15
      %p38 = scmp.eq.s32.totalorder %s37, 0
      %s40 = sadd.s32 %s39, 1
      %s41 = scalar_select %p38, %s39, %s40
      %p44 = pneg %p38
      %p45 = scmp.eq.s32.totalorder %s8, 1
      %p46 = por %p44, %p45
      %p47 = scmp.ne.s32.totalorder %s39, %s42
      %p48 = scmp.eq.s32.totalorder %s8, 0
      %p49 = por %p47, %p48
      %p50 = scmp.ne.s32.totalorder %s39, %s42
      %p51 = scmp.eq.s32.totalorder %s13, 1
      %p52 = por %p50, %p51
      %p53 = scmp.ne.s32.totalorder %s42, %s43
      %p54 = scmp.eq.s32.totalorder %s13, 0
      %p55 = por %p53, %p54
      %p56 = scmp.ne.s32.totalorder %s42, %s43
      %p57 = scmp.eq.s32.totalorder %s14, 1
      %p58 = por %p56, %p57
      %p60 = scmp.ne.s32.totalorder %s43, %s59
      %p61 = scmp.eq.s32.totalorder %s14, 0
      %p62 = por %p60, %p61
      %s63 = ssub.s32 %s8, %s15
      %p64 = scmp.eq.s32.totalorder %s63, 0
      %s66 = sadd.s32 %s65, 1
      %s67 = scalar_select %p64, %s65, %s66
      %p70 = pneg %p64
      %p71 = scmp.eq.s32.totalorder %s8, 1
      %p72 = por %p70, %p71
      %p73 = scmp.ne.s32.totalorder %s65, %s68
      %p74 = scmp.eq.s32.totalorder %s8, 0
      %p75 = por %p73, %p74
      %p76 = scmp.ne.s32.totalorder %s65, %s68
      %p77 = scmp.eq.s32.totalorder %s13, 1
      %p78 = por %p76, %p77
      %p79 = scmp.ne.s32.totalorder %s68, %s69
      %p80 = scmp.eq.s32.totalorder %s13, 0
      %p81 = por %p79, %p80
      %p82 = scmp.ne.s32.totalorder %s68, %s69
      %p83 = scmp.eq.s32.totalorder %s14, 1
      %p84 = por %p82, %p83
      %p86 = scmp.ne.s32.totalorder %s69, %s85
      %p87 = scmp.eq.s32.totalorder %s14, 0
      %p88 = por %p86, %p87
      %p89 = scmp.le.s32.totalorder 1, %s8
      %p90 = scmp.lt.s32.totalorder %s8, 3
      %p91 = pnand %p89, %p90
      %p92 = pneg %p91
      // Predicated region
      $region9: #{primary_caps_forward.1} parent=5 // pred_check
        _
      $region10: #{primary_caps_forward.1} parent=5 // pred_check_branch
        %94 = sbr.rel (%p91) target = $region12
      $region11: #{primary_caps_forward.1} parent=5 // pred_region
        %s95 = ssub.s32 %s8, 1
        // Predicated region
        $region13: #{primary_caps_forward.1} parent=11 // pred_check
          %p96 = pneg %p29
        $region14: #{primary_caps_forward.1} parent=11 // pred_check_branch
          %98 = sbr.rel (%p96) target = $region16
        $region15: #{primary_caps_forward.1} parent=11 // pred_region
          _
        $region16: #{primary_caps_forward.1} parent=11 // pred_fallthru
          _
      $region12: #{primary_caps_forward.1} parent=5 // pred_fallthru
        _
      %p99 = scmp.lt.s32.totalorder %s8, 2
      // Predicated region
      $region17: #{primary_caps_forward.1} parent=5 // pred_check
        %p100 = pneg %p99
      $region18: #{primary_caps_forward.1} parent=5 // pred_check_branch
        %102 = sbr.rel (%p100) target = $region20
      $region19: #{primary_caps_forward.1} parent=5 // pred_region
        // Predicated region
        $region21: #{primary_caps_forward.1} parent=19 // pred_check
          %p103 = pneg %p49
        $region22: #{primary_caps_forward.1} parent=19 // pred_check_branch
          %105 = sbr.rel (%p103) target = $region24
        $region23: #{primary_caps_forward.1} parent=19 // pred_region
          %s106 = sand.u32 %s39, 1
          %s107 = sand.u32 %s39, 1
          %s108 = smul.addr %s107, 328
          %s109 = scalar_lea.vmem [#allocation2], %s108
          %s110 = smul.addr %s8, 4
          %s111 = scalar_lea.vmem %s1, %s110
          // Predicated region
          $region25: #{primary_caps_forward.1} parent=23 // pred_check
            _
          $region26: #{primary_caps_forward.1} parent=23 // pred_check_branch
            %113 = sbr.rel (0) target = $region28
          $region27: #{primary_caps_forward.1} parent=23 // pred_region
            // Predicated region
            $region29: #{primary_caps_forward.1} parent=27 // pred_check
              _
            $region30: #{primary_caps_forward.1} parent=27 // pred_check_branch
              %115 = sbr.rel target = $region32
            $region31: #{primary_caps_forward.1} parent=27 // pred_region
              // Predicated region
              $region44: #{primary_caps_forward.1} parent=31 // pred_check
                _
              $region45: #{primary_caps_forward.1} parent=31 // pred_check_branch
                %293 = sbr.rel (0) target = $region47
              $region46: #{primary_caps_forward.1} parent=31 // pred_region
                loop: start=0, step=1, limit=1
                $region48: #{primary_caps_forward.1} parent=46 // loop_pre_header
                  _
                $region49: #{primary_caps_forward.1} parent=46 // loop_header
                  %s295 = sphi 0, %s299
                  %p296 = scmp.ge.s32.totalorder %s295, 1
                  %s300 = sphi %s111, %s111
                  %s301 = sphi %s109, %s109
                $region50: #{primary_caps_forward.1} parent=46 // loop_header_branch
                  %298 = sbr.rel (%p296) target = $region54
                $region51: #{primary_caps_forward.1} parent=46 // loop_body
                  _
                $region52: #{primary_caps_forward.1} parent=46 // loop_footer
                  %s299 = sadd.s32 1, %s295
                $region53: #{primary_caps_forward.1} parent=46 // loop_footer_branch
                  %294 = sbr.rel target = $region49
                $region54: #{primary_caps_forward.1} parent=46 // loop_exit
                  _
                %s303 = ssub.s32 16, 1
                loop: start=0, step=1, limit=1
                $region55: #{primary_caps_forward.1} parent=46 // loop_pre_header
                  _
                $region56: #{primary_caps_forward.1} parent=46 // loop_header
                  %s305 = sphi 0, %s309
                  %p306 = scmp.ge.s32.totalorder %s305, 1
                  %s310 = sphi %s111, %s111
                  %s311 = sphi %s109, %s109
                $region57: #{primary_caps_forward.1} parent=46 // loop_header_branch
                  %308 = sbr.rel (%p306) target = $region61
                $region58: #{primary_caps_forward.1} parent=46 // loop_body
                  %v312 = vld [vmem:[%s310] sm:%s303]
                  %313 = vst [vmem:[%s311] sm:%s303] %v312
                  %v314 = vld [vmem:[%s310 + $0x8] sm:%s303]
                  %315 = vst [vmem:[%s311 + $0x4] sm:%s303] %v314
                  %v316 = vld [vmem:[%s310 + $0x10] sm:%s303]
                  %317 = vst [vmem:[%s311 + $0x8] sm:%s303] %v316
                  %v318 = vld [vmem:[%s310 + $0x18] sm:%s303]
                  %319 = vst [vmem:[%s311 + $0xc] sm:%s303] %v318
                  %v320 = vld [vmem:[%s310 + $0x20] sm:%s303]
                  %321 = vst [vmem:[%s311 + $0x10] sm:%s303] %v320
                  %v322 = vld [vmem:[%s310 + $0x28] sm:%s303]
                  %323 = vst [vmem:[%s311 + $0x14] sm:%s303] %v322
                  %v324 = vld [vmem:[%s310 + $0x30] sm:%s303]
                  %325 = vst [vmem:[%s311 + $0x18] sm:%s303] %v324
                  %v326 = vld [vmem:[%s310 + $0x38] sm:%s303]
                  %327 = vst [vmem:[%s311 + $0x1c] sm:%s303] %v326
                  %v328 = vld [vmem:[%s310 + $0x40] sm:%s303]
                  %329 = vst [vmem:[%s311 + $0x20] sm:%s303] %v328
                  %v330 = vld [vmem:[%s310 + $0x48] sm:%s303]
                  %331 = vst [vmem:[%s311 + $0x24] sm:%s303] %v330
                  %v332 = vld [vmem:[%s310 + $0x50] sm:%s303]
                  %333 = vst [vmem:[%s311 + $0x28] sm:%s303] %v332
                  %v334 = vld [vmem:[%s310 + $0x58] sm:%s303]
                  %335 = vst [vmem:[%s311 + $0x2c] sm:%s303] %v334
                  %v336 = vld [vmem:[%s310 + $0x60] sm:%s303]
                  %337 = vst [vmem:[%s311 + $0x30] sm:%s303] %v336
                  %v338 = vld [vmem:[%s310 + $0x68] sm:%s303]
                  %339 = vst [vmem:[%s311 + $0x34] sm:%s303] %v338
                  %v340 = vld [vmem:[%s310 + $0x70] sm:%s303]
                  %341 = vst [vmem:[%s311 + $0x38] sm:%s303] %v340
                  %v342 = vld [vmem:[%s310 + $0x78] sm:%s303]
                  %343 = vst [vmem:[%s311 + $0x3c] sm:%s303] %v342
                  %v344 = vld [vmem:[%s310 + $0x80] sm:%s303]
                  %345 = vst [vmem:[%s311 + $0x40] sm:%s303] %v344
                  %v346 = vld [vmem:[%s310 + $0x88] sm:%s303]
                  %347 = vst [vmem:[%s311 + $0x44] sm:%s303] %v346
                  %v348 = vld [vmem:[%s310 + $0x90] sm:%s303]
                  %349 = vst [vmem:[%s311 + $0x48] sm:%s303] %v348
                  %v350 = vld [vmem:[%s310 + $0x98] sm:%s303]
                  %351 = vst [vmem:[%s311 + $0x4c] sm:%s303] %v350
                  %v352 = vld [vmem:[%s310 + $0xa0] sm:%s303]
                  %353 = vst [vmem:[%s311 + $0x50] sm:%s303] %v352
                  %v354 = vld [vmem:[%s310 + $0xa8] sm:%s303]
                  %355 = vst [vmem:[%s311 + $0x54] sm:%s303] %v354
                  %v356 = vld [vmem:[%s310 + $0xb0] sm:%s303]
                  %357 = vst [vmem:[%s311 + $0x58] sm:%s303] %v356
                  %v358 = vld [vmem:[%s310 + $0xb8] sm:%s303]
                  %359 = vst [vmem:[%s311 + $0x5c] sm:%s303] %v358
                  %v360 = vld [vmem:[%s310 + $0xc0] sm:%s303]
                  %361 = vst [vmem:[%s311 + $0x60] sm:%s303] %v360
                  %v362 = vld [vmem:[%s310 + $0xc8] sm:%s303]
                  %363 = vst [vmem:[%s311 + $0x64] sm:%s303] %v362
                  %v364 = vld [vmem:[%s310 + $0xd0] sm:%s303]
                  %365 = vst [vmem:[%s311 + $0x68] sm:%s303] %v364
                  %v366 = vld [vmem:[%s310 + $0xd8] sm:%s303]
                  %367 = vst [vmem:[%s311 + $0x6c] sm:%s303] %v366
                  %v368 = vld [vmem:[%s310 + $0xe0] sm:%s303]
                  %369 = vst [vmem:[%s311 + $0x70] sm:%s303] %v368
                  %v370 = vld [vmem:[%s310 + $0xe8] sm:%s303]
                  %371 = vst [vmem:[%s311 + $0x74] sm:%s303] %v370
                  %v372 = vld [vmem:[%s310 + $0xf0] sm:%s303]
                  %373 = vst [vmem:[%s311 + $0x78] sm:%s303] %v372
                  %v374 = vld [vmem:[%s310 + $0xf8] sm:%s303]
                  %375 = vst [vmem:[%s311 + $0x7c] sm:%s303] %v374
                  %v376 = vld [vmem:[%s310 + $0x100] sm:%s303]
                  %377 = vst [vmem:[%s311 + $0x80] sm:%s303] %v376
                  %v378 = vld [vmem:[%s310 + $0x108] sm:%s303]
                  %379 = vst [vmem:[%s311 + $0x84] sm:%s303] %v378
                  %v380 = vld [vmem:[%s310 + $0x110] sm:%s303]
                  %381 = vst [vmem:[%s311 + $0x88] sm:%s303] %v380
                  %v382 = vld [vmem:[%s310 + $0x118] sm:%s303]
                  %383 = vst [vmem:[%s311 + $0x8c] sm:%s303] %v382
                  %v384 = vld [vmem:[%s310 + $0x120] sm:%s303]
                  %385 = vst [vmem:[%s311 + $0x90] sm:%s303] %v384
                  %v386 = vld [vmem:[%s310 + $0x128] sm:%s303]
                  %387 = vst [vmem:[%s311 + $0x94] sm:%s303] %v386
                  %v388 = vld [vmem:[%s310 + $0x130] sm:%s303]
                  %389 = vst [vmem:[%s311 + $0x98] sm:%s303] %v388
                  %v390 = vld [vmem:[%s310 + $0x138] sm:%s303]
                  %391 = vst [vmem:[%s311 + $0x9c] sm:%s303] %v390
                  %v392 = vld [vmem:[%s310 + $0x140] sm:%s303]
                  %393 = vst [vmem:[%s311 + $0xa0] sm:%s303] %v392
                  %v394 = vld [vmem:[%s310 + $0x148] sm:%s303]
                  %395 = vst [vmem:[%s311 + $0xa4] sm:%s303] %v394
                  %v396 = vld [vmem:[%s310 + $0x150] sm:%s303]
                  %397 = vst [vmem:[%s311 + $0xa8] sm:%s303] %v396
                  %v398 = vld [vmem:[%s310 + $0x158] sm:%s303]
                  %399 = vst [vmem:[%s311 + $0xac] sm:%s303] %v398
                  %v400 = vld [vmem:[%s310 + $0x160] sm:%s303]
                  %401 = vst [vmem:[%s311 + $0xb0] sm:%s303] %v400
                  %v402 = vld [vmem:[%s310 + $0x168] sm:%s303]
                  %403 = vst [vmem:[%s311 + $0xb4] sm:%s303] %v402
                  %v404 = vld [vmem:[%s310 + $0x170] sm:%s303]
                  %405 = vst [vmem:[%s311 + $0xb8] sm:%s303] %v404
                  %v406 = vld [vmem:[%s310 + $0x178] sm:%s303]
                  %407 = vst [vmem:[%s311 + $0xbc] sm:%s303] %v406
                  %v408 = vld [vmem:[%s310 + $0x180] sm:%s303]
                  %409 = vst [vmem:[%s311 + $0xc0] sm:%s303] %v408
                  %v410 = vld [vmem:[%s310 + $0x188] sm:%s303]
                  %411 = vst [vmem:[%s311 + $0xc4] sm:%s303] %v410
                  %v412 = vld [vmem:[%s310 + $0x190] sm:%s303]
                  %413 = vst [vmem:[%s311 + $0xc8] sm:%s303] %v412
                  %v414 = vld [vmem:[%s310 + $0x198] sm:%s303]
                  %415 = vst [vmem:[%s311 + $0xcc] sm:%s303] %v414
                  %v416 = vld [vmem:[%s310 + $0x1a0] sm:%s303]
                  %417 = vst [vmem:[%s311 + $0xd0] sm:%s303] %v416
                  %v418 = vld [vmem:[%s310 + $0x1a8] sm:%s303]
                  %419 = vst [vmem:[%s311 + $0xd4] sm:%s303] %v418
                  %v420 = vld [vmem:[%s310 + $0x1b0] sm:%s303]
                  %421 = vst [vmem:[%s311 + $0xd8] sm:%s303] %v420
                  %v422 = vld [vmem:[%s310 + $0x1b8] sm:%s303]
                  %423 = vst [vmem:[%s311 + $0xdc] sm:%s303] %v422
                  %v424 = vld [vmem:[%s310 + $0x1c0] sm:%s303]
                  %425 = vst [vmem:[%s311 + $0xe0] sm:%s303] %v424
                  %v426 = vld [vmem:[%s310 + $0x1c8] sm:%s303]
                  %427 = vst [vmem:[%s311 + $0xe4] sm:%s303] %v426
                  %v428 = vld [vmem:[%s310 + $0x1d0] sm:%s303]
                  %429 = vst [vmem:[%s311 + $0xe8] sm:%s303] %v428
                  %v430 = vld [vmem:[%s310 + $0x1d8] sm:%s303]
                  %431 = vst [vmem:[%s311 + $0xec] sm:%s303] %v430
                  %v432 = vld [vmem:[%s310 + $0x1e0] sm:%s303]
                  %433 = vst [vmem:[%s311 + $0xf0] sm:%s303] %v432
                  %v434 = vld [vmem:[%s310 + $0x1e8] sm:%s303]
                  %435 = vst [vmem:[%s311 + $0xf4] sm:%s303] %v434
                  %v436 = vld [vmem:[%s310 + $0x1f0] sm:%s303]
                  %437 = vst [vmem:[%s311 + $0xf8] sm:%s303] %v436
                  %v438 = vld [vmem:[%s310 + $0x1f8] sm:%s303]
                  %439 = vst [vmem:[%s311 + $0xfc] sm:%s303] %v438
                  %v440 = vld [vmem:[%s310 + $0x200] sm:%s303]
                  %441 = vst [vmem:[%s311 + $0x100] sm:%s303] %v440
                  %v442 = vld [vmem:[%s310 + $0x208] sm:%s303]
                  %443 = vst [vmem:[%s311 + $0x104] sm:%s303] %v442
                  %v444 = vld [vmem:[%s310 + $0x210] sm:%s303]
                  %445 = vst [vmem:[%s311 + $0x108] sm:%s303] %v444
                  %v446 = vld [vmem:[%s310 + $0x218] sm:%s303]
                  %447 = vst [vmem:[%s311 + $0x10c] sm:%s303] %v446
                  %v448 = vld [vmem:[%s310 + $0x220] sm:%s303]
                  %449 = vst [vmem:[%s311 + $0x110] sm:%s303] %v448
                  %v450 = vld [vmem:[%s310 + $0x228] sm:%s303]
                  %451 = vst [vmem:[%s311 + $0x114] sm:%s303] %v450
                  %v452 = vld [vmem:[%s310 + $0x230] sm:%s303]
                  %453 = vst [vmem:[%s311 + $0x118] sm:%s303] %v452
                  %v454 = vld [vmem:[%s310 + $0x238] sm:%s303]
                  %455 = vst [vmem:[%s311 + $0x11c] sm:%s303] %v454
                  %v456 = vld [vmem:[%s310 + $0x240] sm:%s303]
                  %457 = vst [vmem:[%s311 + $0x120] sm:%s303] %v456
                  %v458 = vld [vmem:[%s310 + $0x248] sm:%s303]
                  %459 = vst [vmem:[%s311 + $0x124] sm:%s303] %v458
                  %v460 = vld [vmem:[%s310 + $0x250] sm:%s303]
                  %461 = vst [vmem:[%s311 + $0x128] sm:%s303] %v460
                  %v462 = vld [vmem:[%s310 + $0x258] sm:%s303]
                  %463 = vst [vmem:[%s311 + $0x12c] sm:%s303] %v462
                  %v464 = vld [vmem:[%s310 + $0x260] sm:%s303]
                  %465 = vst [vmem:[%s311 + $0x130] sm:%s303] %v464
                  %v466 = vld [vmem:[%s310 + $0x268] sm:%s303]
                  %467 = vst [vmem:[%s311 + $0x134] sm:%s303] %v466
                  %v468 = vld [vmem:[%s310 + $0x270] sm:%s303]
                  %469 = vst [vmem:[%s311 + $0x138] sm:%s303] %v468
                  %v470 = vld [vmem:[%s310 + $0x278] sm:%s303]
                  %471 = vst [vmem:[%s311 + $0x13c] sm:%s303] %v470
                  %v472 = vld [vmem:[%s310 + $0x280] sm:%s303]
                  %473 = vst [vmem:[%s311 + $0x140] sm:%s303] %v472
                  %v474 = vld [vmem:[%s310 + $0x288] sm:%s303]
                  %475 = vst [vmem:[%s311 + $0x144] sm:%s303] %v474
                $region59: #{primary_caps_forward.1} parent=46 // loop_footer
                  %s309 = sadd.s32 1, %s305
                $region60: #{primary_caps_forward.1} parent=46 // loop_footer_branch
                  %304 = sbr.rel target = $region56
                $region61: #{primary_caps_forward.1} parent=46 // loop_exit
                  _
              $region47: #{primary_caps_forward.1} parent=31 // pred_fallthru
                _
            $region32: #{primary_caps_forward.1} parent=27 // pred_fallthru
              _
            // Predicated region
            $region33: #{primary_caps_forward.1} parent=27 // pred_check
              _
            $region34: #{primary_caps_forward.1} parent=27 // pred_check_branch
              %117 = sbr.rel (0) target = $region36
            $region35: #{primary_caps_forward.1} parent=27 // pred_region
              %s119 = ssub.s32 16, 1
              loop: start=0, step=1, limit=1
              $region37: #{primary_caps_forward.1} parent=35 // loop_pre_header
                _
              $region38: #{primary_caps_forward.1} parent=35 // loop_header
                %s121 = sphi 0, %s125
                %p122 = scmp.ge.s32.totalorder %s121, 1
                %s126 = sphi %s111, %s111
                %s127 = sphi %s109, %s109
              $region39: #{primary_caps_forward.1} parent=35 // loop_header_branch
                %124 = sbr.rel (%p122) target = $region43
              $region40: #{primary_caps_forward.1} parent=35 // loop_body
                %v128 = vld [vmem:[%s126] sm:%s119]
                %129 = vst [vmem:[%s127] sm:%s119] %v128
                %v130 = vld [vmem:[%s126 + $0x8] sm:%s119]
                %131 = vst [vmem:[%s127 + $0x4] sm:%s119] %v130
                %v132 = vld [vmem:[%s126 + $0x10] sm:%s119]
                %133 = vst [vmem:[%s127 + $0x8] sm:%s119] %v132
                %v134 = vld [vmem:[%s126 + $0x18] sm:%s119]
                %135 = vst [vmem:[%s127 + $0xc] sm:%s119] %v134
                %v136 = vld [vmem:[%s126 + $0x20] sm:%s119]
                %137 = vst [vmem:[%s127 + $0x10] sm:%s119] %v136
                %v138 = vld [vmem:[%s126 + $0x28] sm:%s119]
                %139 = vst [vmem:[%s127 + $0x14] sm:%s119] %v138
                %v140 = vld [vmem:[%s126 + $0x30] sm:%s119]
                %141 = vst [vmem:[%s127 + $0x18] sm:%s119] %v140
                %v142 = vld [vmem:[%s126 + $0x38] sm:%s119]
                %143 = vst [vmem:[%s127 + $0x1c] sm:%s119] %v142
                %v144 = vld [vmem:[%s126 + $0x40] sm:%s119]
                %145 = vst [vmem:[%s127 + $0x20] sm:%s119] %v144
                %v146 = vld [vmem:[%s126 + $0x48] sm:%s119]
                %147 = vst [vmem:[%s127 + $0x24] sm:%s119] %v146
                %v148 = vld [vmem:[%s126 + $0x50] sm:%s119]
                %149 = vst [vmem:[%s127 + $0x28] sm:%s119] %v148
                %v150 = vld [vmem:[%s126 + $0x58] sm:%s119]
                %151 = vst [vmem:[%s127 + $0x2c] sm:%s119] %v150
                %v152 = vld [vmem:[%s126 + $0x60] sm:%s119]
                %153 = vst [vmem:[%s127 + $0x30] sm:%s119] %v152
                %v154 = vld [vmem:[%s126 + $0x68] sm:%s119]
                %155 = vst [vmem:[%s127 + $0x34] sm:%s119] %v154
                %v156 = vld [vmem:[%s126 + $0x70] sm:%s119]
                %157 = vst [vmem:[%s127 + $0x38] sm:%s119] %v156
                %v158 = vld [vmem:[%s126 + $0x78] sm:%s119]
                %159 = vst [vmem:[%s127 + $0x3c] sm:%s119] %v158
                %v160 = vld [vmem:[%s126 + $0x80] sm:%s119]
                %161 = vst [vmem:[%s127 + $0x40] sm:%s119] %v160
                %v162 = vld [vmem:[%s126 + $0x88] sm:%s119]
                %163 = vst [vmem:[%s127 + $0x44] sm:%s119] %v162
                %v164 = vld [vmem:[%s126 + $0x90] sm:%s119]
                %165 = vst [vmem:[%s127 + $0x48] sm:%s119] %v164
                %v166 = vld [vmem:[%s126 + $0x98] sm:%s119]
                %167 = vst [vmem:[%s127 + $0x4c] sm:%s119] %v166
                %v168 = vld [vmem:[%s126 + $0xa0] sm:%s119]
                %169 = vst [vmem:[%s127 + $0x50] sm:%s119] %v168
                %v170 = vld [vmem:[%s126 + $0xa8] sm:%s119]
                %171 = vst [vmem:[%s127 + $0x54] sm:%s119] %v170
                %v172 = vld [vmem:[%s126 + $0xb0] sm:%s119]
                %173 = vst [vmem:[%s127 + $0x58] sm:%s119] %v172
                %v174 = vld [vmem:[%s126 + $0xb8] sm:%s119]
                %175 = vst [vmem:[%s127 + $0x5c] sm:%s119] %v174
                %v176 = vld [vmem:[%s126 + $0xc0] sm:%s119]
                %177 = vst [vmem:[%s127 + $0x60] sm:%s119] %v176
                %v178 = vld [vmem:[%s126 + $0xc8] sm:%s119]
                %179 = vst [vmem:[%s127 + $0x64] sm:%s119] %v178
                %v180 = vld [vmem:[%s126 + $0xd0] sm:%s119]
                %181 = vst [vmem:[%s127 + $0x68] sm:%s119] %v180
                %v182 = vld [vmem:[%s126 + $0xd8] sm:%s119]
                %183 = vst [vmem:[%s127 + $0x6c] sm:%s119] %v182
                %v184 = vld [vmem:[%s126 + $0xe0] sm:%s119]
                %185 = vst [vmem:[%s127 + $0x70] sm:%s119] %v184
                %v186 = vld [vmem:[%s126 + $0xe8] sm:%s119]
                %187 = vst [vmem:[%s127 + $0x74] sm:%s119] %v186
                %v188 = vld [vmem:[%s126 + $0xf0] sm:%s119]
                %189 = vst [vmem:[%s127 + $0x78] sm:%s119] %v188
                %v190 = vld [vmem:[%s126 + $0xf8] sm:%s119]
                %191 = vst [vmem:[%s127 + $0x7c] sm:%s119] %v190
                %v192 = vld [vmem:[%s126 + $0x100] sm:%s119]
                %193 = vst [vmem:[%s127 + $0x80] sm:%s119] %v192
                %v194 = vld [vmem:[%s126 + $0x108] sm:%s119]
                %195 = vst [vmem:[%s127 + $0x84] sm:%s119] %v194
                %v196 = vld [vmem:[%s126 + $0x110] sm:%s119]
                %197 = vst [vmem:[%s127 + $0x88] sm:%s119] %v196
                %v198 = vld [vmem:[%s126 + $0x118] sm:%s119]
                %199 = vst [vmem:[%s127 + $0x8c] sm:%s119] %v198
                %v200 = vld [vmem:[%s126 + $0x120] sm:%s119]
                %201 = vst [vmem:[%s127 + $0x90] sm:%s119] %v200
                %v202 = vld [vmem:[%s126 + $0x128] sm:%s119]
                %203 = vst [vmem:[%s127 + $0x94] sm:%s119] %v202
                %v204 = vld [vmem:[%s126 + $0x130] sm:%s119]
                %205 = vst [vmem:[%s127 + $0x98] sm:%s119] %v204
                %v206 = vld [vmem:[%s126 + $0x138] sm:%s119]
                %207 = vst [vmem:[%s127 + $0x9c] sm:%s119] %v206
                %v208 = vld [vmem:[%s126 + $0x140] sm:%s119]
                %209 = vst [vmem:[%s127 + $0xa0] sm:%s119] %v208
                %v210 = vld [vmem:[%s126 + $0x148] sm:%s119]
                %211 = vst [vmem:[%s127 + $0xa4] sm:%s119] %v210
                %v212 = vld [vmem:[%s126 + $0x150] sm:%s119]
                %213 = vst [vmem:[%s127 + $0xa8] sm:%s119] %v212
                %v214 = vld [vmem:[%s126 + $0x158] sm:%s119]
                %215 = vst [vmem:[%s127 + $0xac] sm:%s119] %v214
                %v216 = vld [vmem:[%s126 + $0x160] sm:%s119]
                %217 = vst [vmem:[%s127 + $0xb0] sm:%s119] %v216
                %v218 = vld [vmem:[%s126 + $0x168] sm:%s119]
                %219 = vst [vmem:[%s127 + $0xb4] sm:%s119] %v218
                %v220 = vld [vmem:[%s126 + $0x170] sm:%s119]
                %221 = vst [vmem:[%s127 + $0xb8] sm:%s119] %v220
                %v222 = vld [vmem:[%s126 + $0x178] sm:%s119]
                %223 = vst [vmem:[%s127 + $0xbc] sm:%s119] %v222
                %v224 = vld [vmem:[%s126 + $0x180] sm:%s119]
                %225 = vst [vmem:[%s127 + $0xc0] sm:%s119] %v224
                %v226 = vld [vmem:[%s126 + $0x188] sm:%s119]
                %227 = vst [vmem:[%s127 + $0xc4] sm:%s119] %v226
                %v228 = vld [vmem:[%s126 + $0x190] sm:%s119]
                %229 = vst [vmem:[%s127 + $0xc8] sm:%s119] %v228
                %v230 = vld [vmem:[%s126 + $0x198] sm:%s119]
                %231 = vst [vmem:[%s127 + $0xcc] sm:%s119] %v230
                %v232 = vld [vmem:[%s126 + $0x1a0] sm:%s119]
                %233 = vst [vmem:[%s127 + $0xd0] sm:%s119] %v232
                %v234 = vld [vmem:[%s126 + $0x1a8] sm:%s119]
                %235 = vst [vmem:[%s127 + $0xd4] sm:%s119] %v234
                %v236 = vld [vmem:[%s126 + $0x1b0] sm:%s119]
                %237 = vst [vmem:[%s127 + $0xd8] sm:%s119] %v236
                %v238 = vld [vmem:[%s126 + $0x1b8] sm:%s119]
                %239 = vst [vmem:[%s127 + $0xdc] sm:%s119] %v238
                %v240 = vld [vmem:[%s126 + $0x1c0] sm:%s119]
                %241 = vst [vmem:[%s127 + $0xe0] sm:%s119] %v240
                %v242 = vld [vmem:[%s126 + $0x1c8] sm:%s119]
                %243 = vst [vmem:[%s127 + $0xe4] sm:%s119] %v242
                %v244 = vld [vmem:[%s126 + $0x1d0] sm:%s119]
                %245 = vst [vmem:[%s127 + $0xe8] sm:%s119] %v244
                %v246 = vld [vmem:[%s126 + $0x1d8] sm:%s119]
                %247 = vst [vmem:[%s127 + $0xec] sm:%s119] %v246
                %v248 = vld [vmem:[%s126 + $0x1e0] sm:%s119]
                %249 = vst [vmem:[%s127 + $0xf0] sm:%s119] %v248
                %v250 = vld [vmem:[%s126 + $0x1e8] sm:%s119]
                %251 = vst [vmem:[%s127 + $0xf4] sm:%s119] %v250
                %v252 = vld [vmem:[%s126 + $0x1f0] sm:%s119]
                %253 = vst [vmem:[%s127 + $0xf8] sm:%s119] %v252
                %v254 = vld [vmem:[%s126 + $0x1f8] sm:%s119]
                %255 = vst [vmem:[%s127 + $0xfc] sm:%s119] %v254
                %v256 = vld [vmem:[%s126 + $0x200] sm:%s119]
                %257 = vst [vmem:[%s127 + $0x100] sm:%s119] %v256
                %v258 = vld [vmem:[%s126 + $0x208] sm:%s119]
                %259 = vst [vmem:[%s127 + $0x104] sm:%s119] %v258
                %v260 = vld [vmem:[%s126 + $0x210] sm:%s119]
                %261 = vst [vmem:[%s127 + $0x108] sm:%s119] %v260
                %v262 = vld [vmem:[%s126 + $0x218] sm:%s119]
                %263 = vst [vmem:[%s127 + $0x10c] sm:%s119] %v262
                %v264 = vld [vmem:[%s126 + $0x220] sm:%s119]
                %265 = vst [vmem:[%s127 + $0x110] sm:%s119] %v264
                %v266 = vld [vmem:[%s126 + $0x228] sm:%s119]
                %267 = vst [vmem:[%s127 + $0x114] sm:%s119] %v266
                %v268 = vld [vmem:[%s126 + $0x230] sm:%s119]
                %269 = vst [vmem:[%s127 + $0x118] sm:%s119] %v268
                %v270 = vld [vmem:[%s126 + $0x238] sm:%s119]
                %271 = vst [vmem:[%s127 + $0x11c] sm:%s119] %v270
                %v272 = vld [vmem:[%s126 + $0x240] sm:%s119]
                %273 = vst [vmem:[%s127 + $0x120] sm:%s119] %v272
                %v274 = vld [vmem:[%s126 + $0x248] sm:%s119]
                %275 = vst [vmem:[%s127 + $0x124] sm:%s119] %v274
                %v276 = vld [vmem:[%s126 + $0x250] sm:%s119]
                %277 = vst [vmem:[%s127 + $0x128] sm:%s119] %v276
                %v278 = vld [vmem:[%s126 + $0x258] sm:%s119]
                %279 = vst [vmem:[%s127 + $0x12c] sm:%s119] %v278
                %v280 = vld [vmem:[%s126 + $0x260] sm:%s119]
                %281 = vst [vmem:[%s127 + $0x130] sm:%s119] %v280
                %v282 = vld [vmem:[%s126 + $0x268] sm:%s119]
                %283 = vst [vmem:[%s127 + $0x134] sm:%s119] %v282
                %v284 = vld [vmem:[%s126 + $0x270] sm:%s119]
                %285 = vst [vmem:[%s127 + $0x138] sm:%s119] %v284
                %v286 = vld [vmem:[%s126 + $0x278] sm:%s119]
                %287 = vst [vmem:[%s127 + $0x13c] sm:%s119] %v286
                %v288 = vld [vmem:[%s126 + $0x280] sm:%s119]
                %289 = vst [vmem:[%s127 + $0x140] sm:%s119] %v288
                %v290 = vld [vmem:[%s126 + $0x288] sm:%s119]
                %291 = vst [vmem:[%s127 + $0x144] sm:%s119] %v290
              $region41: #{primary_caps_forward.1} parent=35 // loop_footer
                %s125 = sadd.s32 1, %s121
              $region42: #{primary_caps_forward.1} parent=35 // loop_footer_branch
                %120 = sbr.rel target = $region38
              $region43: #{primary_caps_forward.1} parent=35 // loop_exit
                _
            $region36: #{primary_caps_forward.1} parent=27 // pred_fallthru
              _
          $region28: #{primary_caps_forward.1} parent=23 // pred_fallthru
            _
          %476 = vnop
        $region24: #{primary_caps_forward.1} parent=19 // pred_fallthru
          _
      $region20: #{primary_caps_forward.1} parent=5 // pred_fallthru
        _
      %p477 = scmp.le.s32.totalorder 1, %s8
      %p478 = scmp.lt.s32.totalorder %s8, 3
      %p479 = pnand %p477, %p478
      %p480 = pneg %p479
      // Predicated region
      $region62: #{primary_caps_forward.1} parent=5 // pred_check
        _
      $region63: #{primary_caps_forward.1} parent=5 // pred_check_branch
        %482 = sbr.rel (%p479) target = $region65
      $region64: #{primary_caps_forward.1} parent=5 // pred_region
        %s483 = ssub.s32 %s8, 1
        %s484 = sand.u32 %s42, 1
        %s485 = sand.u32 %s42, 1
        %s486 = smul.addr %s485, 328
        %s487 = scalar_lea.vmem [#allocation2], %s486
        // Predicated region
        $region66: #{primary_caps_forward.1} parent=64 // pred_check
          %p488 = pneg %p55
        $region67: #{primary_caps_forward.1} parent=64 // pred_check_branch
          %490 = sbr.rel (%p488) target = $region69
        $region68: #{primary_caps_forward.1} parent=64 // pred_region
          _
        $region69: #{primary_caps_forward.1} parent=64 // pred_fallthru
          _
        %p491 = pneg %p29
        %p492 = pneg %p26
        %s493 = sand.u32 %s42, 1
        %s494 = sand.u32 %s42, 1
        %s495 = smul.addr %s494, 328
        %s496 = scalar_lea.vmem [#allocation2], %s495
        %p497 = pneg %p55
        %p498 = pneg %p52
        %p499 = pneg %p81
        %p500 = pneg %p78
        %s501 = sand.u32 %s68, 1
        %s502 = sand.u32 %s68, 1
        %s503 = smul.addr %s502, 32
        %s504 = scalar_lea.vmem [#allocation3], %s503
        %v506 = vld [vmem:[%s0] sm:$0xff]
        %v507 = vld [vmem:[%s0 + $0x8] sm:$0xff]
        %v508 = vld [vmem:[%s0 + $0x10] sm:$0xff]
        %v509 = vld [vmem:[%s0 + $0x18] sm:$0xff]
        %v510 = vld [vmem:[%s0 + $0x20] sm:$0xff]
        %v511 = vld [vmem:[%s0 + $0x28] sm:$0xff]
        %v512 = vld [vmem:[%s0 + $0x30] sm:$0xff]
        %v513 = vld [vmem:[%s0 + $0x38] sm:$0xff]
        %v514 = vld [vmem:[%s0 + $0x40] sm:$0xff]
        %v515 = vld [vmem:[%s0 + $0x48] sm:$0xff]
        %v516 = vld [vmem:[%s0 + $0x50] sm:$0xff]
        %v517 = vld [vmem:[%s0 + $0x58] sm:$0xff]
        %v518 = vld [vmem:[%s487] sm:$0xf]
        %v519 = vld [vmem:[%s487 + $0x4] sm:$0xf]
        %v520 = vld [vmem:[%s487 + $0x8] sm:$0xf]
        %v521 = vld [vmem:[%s487 + $0xc] sm:$0xf]
        %v522 = vld [vmem:[%s487 + $0x10] sm:$0xf]
        %v523 = vld [vmem:[%s487 + $0x14] sm:$0xf]
        %v524 = vld [vmem:[%s487 + $0x18] sm:$0xf]
        %v525 = vld [vmem:[%s487 + $0x1c] sm:$0xf]
        %v526 = vld [vmem:[%s487 + $0x20] sm:$0xf]
        %v527 = vld [vmem:[%s487 + $0x24] sm:$0xf]
        %v528 = vld [vmem:[%s487 + $0x28] sm:$0xf]
        %v529 = vld [vmem:[%s487 + $0x2c] sm:$0xf]
        %v530 = vld [vmem:[%s487 + $0x30] sm:$0xf]
        %v531 = vld [vmem:[%s487 + $0x34] sm:$0xf]
        %v532 = vld [vmem:[%s487 + $0x38] sm:$0xf]
        %v533 = vld [vmem:[%s487 + $0x3c] sm:$0xf]
        %v534 = vld [vmem:[%s487 + $0x40] sm:$0xf]
        %v535 = vld [vmem:[%s487 + $0x44] sm:$0xf]
        %v536 = vld [vmem:[%s487 + $0x48] sm:$0xf]
        %v537 = vld [vmem:[%s487 + $0x4c] sm:$0xf]
        %v538 = vld [vmem:[%s487 + $0x50] sm:$0xf]
        %v539 = vld [vmem:[%s487 + $0x54] sm:$0xf]
        %v540 = vld [vmem:[%s487 + $0x58] sm:$0xf]
        %v541 = vld [vmem:[%s487 + $0x5c] sm:$0xf]
        %v542 = vld [vmem:[%s487 + $0x60] sm:$0xf]
        %v543 = vld [vmem:[%s487 + $0x64] sm:$0xf]
        %v544 = vld [vmem:[%s487 + $0x68] sm:$0xf]
        %v545 = vld [vmem:[%s487 + $0x6c] sm:$0xf]
        %v546 = vld [vmem:[%s487 + $0x70] sm:$0xf]
        %v547 = vld [vmem:[%s487 + $0x74] sm:$0xf]
        %v548 = vld [vmem:[%s487 + $0x78] sm:$0xf]
        %v549 = vld [vmem:[%s487 + $0x7c] sm:$0xf]
        %v550 = vld [vmem:[%s487 + $0x80] sm:$0xf]
        %v551 = vld [vmem:[%s487 + $0x84] sm:$0xf]
        %v552 = vld [vmem:[%s487 + $0x88] sm:$0xf]
        %v553 = vld [vmem:[%s487 + $0x8c] sm:$0xf]
        %v554 = vld [vmem:[%s487 + $0x90] sm:$0xf]
        %v555 = vld [vmem:[%s487 + $0x94] sm:$0xf]
        %v556 = vld [vmem:[%s487 + $0x98] sm:$0xf]
        %v557 = vld [vmem:[%s487 + $0x9c] sm:$0xf]
        %v558 = vld [vmem:[%s487 + $0xa0] sm:$0xf]
        %v559 = vld [vmem:[%s487 + $0xa4] sm:$0xf]
        %v560 = vld [vmem:[%s487 + $0xa8] sm:$0xf]
        %v561 = vld [vmem:[%s487 + $0xac] sm:$0xf]
        %v562 = vld [vmem:[%s487 + $0xb0] sm:$0xf]
        %v563 = vld [vmem:[%s487 + $0xb4] sm:$0xf]
        %v564 = vld [vmem:[%s487 + $0xb8] sm:$0xf]
        %v565 = vld [vmem:[%s487 + $0xbc] sm:$0xf]
        %v566 = vld [vmem:[%s487 + $0xc0] sm:$0xf]
        %v567 = vld [vmem:[%s487 + $0xc4] sm:$0xf]
        %v568 = vld [vmem:[%s487 + $0xc8] sm:$0xf]
        %v569 = vld [vmem:[%s487 + $0xcc] sm:$0xf]
        %v570 = vld [vmem:[%s487 + $0xd0] sm:$0xf]
        %v571 = vld [vmem:[%s487 + $0xd4] sm:$0xf]
        %v572 = vld [vmem:[%s487 + $0xd8] sm:$0xf]
        %v573 = vld [vmem:[%s487 + $0xdc] sm:$0xf]
        %v574 = vld [vmem:[%s487 + $0xe0] sm:$0xf]
        %v575 = vld [vmem:[%s487 + $0xe4] sm:$0xf]
        %v576 = vld [vmem:[%s487 + $0xe8] sm:$0xf]
        %v577 = vld [vmem:[%s487 + $0xec] sm:$0xf]
        %v578 = vld [vmem:[%s487 + $0xf0] sm:$0xf]
        %v579 = vld [vmem:[%s487 + $0xf4] sm:$0xf]
        %v580 = vld [vmem:[%s487 + $0xf8] sm:$0xf]
        %v581 = vld [vmem:[%s487 + $0xfc] sm:$0xf]
        %v582 = vld [vmem:[%s487 + $0x100] sm:$0xf]
        %v583 = vld [vmem:[%s487 + $0x104] sm:$0xf]
        %v584 = vld [vmem:[%s487 + $0x108] sm:$0xf]
        %v585 = vld [vmem:[%s487 + $0x10c] sm:$0xf]
        %v586 = vld [vmem:[%s487 + $0x110] sm:$0xf]
        %v587 = vld [vmem:[%s487 + $0x114] sm:$0xf]
        %v588 = vld [vmem:[%s487 + $0x118] sm:$0xf]
        %v589 = vld [vmem:[%s487 + $0x11c] sm:$0xf]
        %v590 = vld [vmem:[%s487 + $0x120] sm:$0xf]
        %v591 = vld [vmem:[%s487 + $0x124] sm:$0xf]
        %v592 = vld [vmem:[%s487 + $0x128] sm:$0xf]
        %v593 = vld [vmem:[%s487 + $0x12c] sm:$0xf]
        %v594 = vld [vmem:[%s487 + $0x130] sm:$0xf]
        %v595 = vld [vmem:[%s487 + $0x134] sm:$0xf]
        %v596 = vld [vmem:[%s487 + $0x138] sm:$0xf]
        %v597 = vld [vmem:[%s487 + $0x13c] sm:$0xf]
        %v598 = vld [vmem:[%s487 + $0x140] sm:$0xf]
        %v599 = vld [vmem:[%s487 + $0x144] sm:$0xf]
        %v612 = vunpack.c.l.b16 %v506
        %v613 = vunpack.c.h.b16 %v506
        %v614 = vunpack.c.l.b16 %v507
        %v615 = vunpack.c.h.b16 %v507
        %v616 = vunpack.c.l.b16 %v508
        %v617 = vunpack.c.h.b16 %v508
        %v618 = vunpack.c.l.b16 %v509
        %v619 = vunpack.c.h.b16 %v509
        %v620 = vunpack.c.l.b16 %v510
        %v621 = vunpack.c.h.b16 %v510
        %v622 = vunpack.c.l.b16 %v511
        %v623 = vunpack.c.h.b16 %v511
        %v624 = vunpack.c.l.b16 %v512
        %v625 = vunpack.c.h.b16 %v512
        %v626 = vunpack.c.l.b16 %v513
        %v627 = vunpack.c.h.b16 %v513
        %v628 = vunpack.c.l.b16 %v514
        %v629 = vunpack.c.h.b16 %v514
        %v630 = vunpack.c.l.b16 %v515
        %v631 = vunpack.c.h.b16 %v515
        %v632 = vunpack.c.l.b16 %v516
        %v633 = vunpack.c.h.b16 %v516
        %v634 = vunpack.c.l.b16 %v517
        %v635 = vunpack.c.h.b16 %v517
        %v636 = vpack.c.b16 %v618, %v612
        %v637 = vpack.c.b16 %v619, %v613
        %v638 = vpack.c.b16 %v620, %v614
        %v639 = vpack.c.b16 %v621, %v615
        %v640 = vpack.c.b16 %v622, %v616
        %v641 = vpack.c.b16 %v623, %v617
        %v642 = vpack.c.b16 %v630, %v624
        %v643 = vpack.c.b16 %v631, %v625
        %v644 = vpack.c.b16 %v632, %v626
        %v645 = vpack.c.b16 %v633, %v627
        %v646 = vpack.c.b16 %v634, %v628
        %v647 = vpack.c.b16 %v635, %v629
        %v740 = vunpack.c.l.b16 %v518
        %v741 = vunpack.c.l.b16 %v519
        %v742 = vunpack.c.l.b16 %v520
        %v743 = vunpack.c.l.b16 %v521
        %v744 = vunpack.c.l.b16 %v522
        %v745 = vunpack.c.l.b16 %v523
        %v746 = vunpack.c.l.b16 %v524
        %v747 = vunpack.c.l.b16 %v525
        %v748 = vunpack.c.l.b16 %v526
        %v749 = vunpack.c.l.b16 %v527
        %v750 = vunpack.c.l.b16 %v528
        %v751 = vunpack.c.l.b16 %v529
        %v752 = vunpack.c.l.b16 %v530
        %v753 = vunpack.c.l.b16 %v531
        %v754 = vunpack.c.l.b16 %v532
        %v755 = vunpack.c.l.b16 %v533
        %v756 = vunpack.c.l.b16 %v534
        %v757 = vunpack.c.l.b16 %v535
        %v758 = vunpack.c.l.b16 %v536
        %v759 = vunpack.c.l.b16 %v537
        %v760 = vunpack.c.l.b16 %v538
        %v761 = vunpack.c.l.b16 %v539
        %v762 = vunpack.c.l.b16 %v540
        %v763 = vunpack.c.l.b16 %v541
        %v764 = vunpack.c.l.b16 %v542
        %v765 = vunpack.c.l.b16 %v543
        %v766 = vunpack.c.l.b16 %v544
        %v767 = vunpack.c.l.b16 %v545
        %v768 = vunpack.c.l.b16 %v546
        %v769 = vunpack.c.l.b16 %v547
        %v770 = vunpack.c.l.b16 %v548
        %v771 = vunpack.c.l.b16 %v549
        %v772 = vunpack.c.l.b16 %v550
        %v773 = vunpack.c.l.b16 %v551
        %v774 = vunpack.c.l.b16 %v552
        %v775 = vunpack.c.l.b16 %v553
        %v776 = vunpack.c.l.b16 %v554
        %v777 = vunpack.c.l.b16 %v555
        %v778 = vunpack.c.l.b16 %v556
        %v779 = vunpack.c.l.b16 %v557
        %v780 = vunpack.c.l.b16 %v558
        %v781 = vunpack.c.l.b16 %v559
        %v782 = vunpack.c.l.b16 %v560
        %v783 = vunpack.c.l.b16 %v561
        %v784 = vunpack.c.l.b16 %v562
        %v785 = vunpack.c.l.b16 %v563
        %v786 = vunpack.c.l.b16 %v564
        %v787 = vunpack.c.l.b16 %v565
        %v788 = vunpack.c.l.b16 %v566
        %v789 = vunpack.c.l.b16 %v567
        %v790 = vunpack.c.l.b16 %v568
        %v791 = vunpack.c.l.b16 %v569
        %v792 = vunpack.c.l.b16 %v570
        %v793 = vunpack.c.l.b16 %v571
        %v794 = vunpack.c.l.b16 %v572
        %v795 = vunpack.c.l.b16 %v573
        %v796 = vunpack.c.l.b16 %v574
        %v797 = vunpack.c.l.b16 %v575
        %v798 = vunpack.c.l.b16 %v576
        %v799 = vunpack.c.l.b16 %v577
        %v800 = vunpack.c.l.b16 %v578
        %v801 = vunpack.c.l.b16 %v579
        %v802 = vunpack.c.l.b16 %v580
        %v803 = vunpack.c.l.b16 %v581
        %v804 = vunpack.c.l.b16 %v582
        %v805 = vunpack.c.l.b16 %v583
        %v806 = vunpack.c.l.b16 %v584
        %v807 = vunpack.c.l.b16 %v585
        %v808 = vunpack.c.l.b16 %v586
        %v809 = vunpack.c.l.b16 %v587
        %v810 = vunpack.c.l.b16 %v588
        %v811 = vunpack.c.l.b16 %v589
        %v812 = vunpack.c.l.b16 %v590
        %v813 = vunpack.c.l.b16 %v591
        %v814 = vunpack.c.l.b16 %v592
        %v815 = vunpack.c.l.b16 %v593
        %v816 = vunpack.c.l.b16 %v594
        %v817 = vunpack.c.l.b16 %v595
        %v818 = vunpack.c.l.b16 %v596
        %v819 = vunpack.c.l.b16 %v597
        %v820 = vunpack.c.l.b16 %v598
        %v821 = vunpack.c.l.b16 %v599
        %v822 = vpack.c.b16 %v741, %v740
        %v823 = vpack.c.b16 %v743, %v742
        %v824 = vpack.c.b16 %v745, %v744
        %v825 = vpack.c.b16 %v747, %v746
        %v826 = vpack.c.b16 %v749, %v748
        %v827 = vpack.c.b16 %v751, %v750
        %v828 = vpack.c.b16 %v753, %v752
        %v829 = vpack.c.b16 %v755, %v754
        %v830 = vpack.c.b16 %v757, %v756
        %v831 = vpack.c.b16 %v759, %v758
        %v832 = vpack.c.b16 %v761, %v760
        %v833 = vpack.c.b16 %v763, %v762
        %v834 = vpack.c.b16 %v765, %v764
        %v835 = vpack.c.b16 %v767, %v766
        %v836 = vpack.c.b16 %v769, %v768
        %v837 = vpack.c.b16 %v771, %v770
        %v838 = vpack.c.b16 %v773, %v772
        %v839 = vpack.c.b16 %v775, %v774
        %v840 = vpack.c.b16 %v777, %v776
        %v841 = vpack.c.b16 %v779, %v778
        %v842 = vpack.c.b16 %v781, %v780
        %v843 = vpack.c.b16 %v783, %v782
        %v844 = vpack.c.b16 %v785, %v784
        %v845 = vpack.c.b16 %v787, %v786
        %v846 = vpack.c.b16 %v789, %v788
        %v847 = vpack.c.b16 %v791, %v790
        %v848 = vpack.c.b16 %v793, %v792
        %v849 = vpack.c.b16 %v795, %v794
        %v850 = vpack.c.b16 %v797, %v796
        %v851 = vpack.c.b16 %v799, %v798
        %v852 = vpack.c.b16 %v801, %v800
        %v853 = vpack.c.b16 %v803, %v802
        %v854 = vpack.c.b16 %v805, %v804
        %v855 = vpack.c.b16 %v807, %v806
        %v856 = vpack.c.b16 %v809, %v808
        %v857 = vpack.c.b16 %v811, %v810
        %v858 = vpack.c.b16 %v813, %v812
        %v859 = vpack.c.b16 %v815, %v814
        %v860 = vpack.c.b16 %v817, %v816
        %v861 = vpack.c.b16 %v819, %v818
        %v862 = vpack.c.b16 %v821, %v820
        %vm904 = vcmask 130048
        %v906 = vsel %vm904, %v641, 0
        %v909 = vsel %vm904, %v647, 0
        %911 = vmatprep.subr.bf16.mxu0 0
        %912 = vmatpush1.bf16.msra.mxu0 %v829
        %913 = vmatprep.subr.bf16.mxu0 0
        %914 = vmatpush1.bf16.msra.mxu0 %v828
        %915 = vmatprep.subr.bf16.mxu0 0
        %916 = vmatpush1.bf16.msra.mxu0 %v827
        %917 = vmatprep.subr.bf16.mxu0 0
        %918 = vmatpush1.bf16.msra.mxu0 %v826
        %919 = vmatprep.subr.bf16.mxu0 0
        %920 = vmatpush1.bf16.msra.mxu0 %v825
        %921 = vmatprep.subr.bf16.mxu0 0
        %922 = vmatpush1.bf16.msra.mxu0 %v824
        %923 = vmatprep.subr.bf16.mxu0 0
        %924 = vmatpush1.bf16.msra.mxu0 %v823
        %925 = vmatprep.subr.bf16.mxu0 0
        %926 = vmatpush1.bf16.msra.mxu0 %v822
        %927 = vmatprep.subr.bf16.mxu0 0
        %928 = vmatpush2.bf16.msra.mxu0 %v837
        %929 = vmatprep.subr.bf16.mxu0 0
        %930 = vmatpush2.bf16.msra.mxu0 %v836
        %931 = vmatprep.subr.bf16.mxu0 0
        %932 = vmatpush2.bf16.msra.mxu0 %v835
        %933 = vmatprep.subr.bf16.mxu0 0
        %934 = vmatpush2.bf16.msra.mxu0 %v834
        %935 = vmatprep.subr.bf16.mxu0 0
        %936 = vmatpush2.bf16.msra.mxu0 %v833
        %937 = vmatprep.subr.bf16.mxu0 0
        %938 = vmatpush2.bf16.msra.mxu0 %v832
        %939 = vmatprep.subr.bf16.mxu0 0
        %940 = vmatpush2.bf16.msra.mxu0 %v831
        %941 = vmatprep.subr.bf16.mxu0 0
        %942 = vmatpush2.bf16.msra.mxu0 %v830
        %943 = vmatprep.mubr.bf16.mxu0 %v637
        %944 = vmatmul.mubr.bf16.gmra.mxu0 %v636
        %v945 = vpop.f32.mrf.mxu0
        %v946 = vadd.f32 0.0, %v945
        %v947 = vpop.f32.mrf.mxu0
        %v948 = vpop.f32.mrf.mxu0
        %v949 = vadd.f32 0.0, %v948
        %v950 = vpop.f32.mrf.mxu0
        %951 = vmatprep.mubr.bf16.mxu0 %v643
        %952 = vmatmul.mubr.bf16.gmra.mxu0 %v642
        %v953 = vpop.f32.mrf.mxu0
        %v954 = vadd.f32 0.0, %v953
        %v955 = vpop.f32.mrf.mxu0
        %v956 = vpop.f32.mrf.mxu0
        %v957 = vadd.f32 0.0, %v956
        %v958 = vpop.f32.mrf.mxu0
        %959 = vdwg.mxu0
        %960 = vmatprep.subr.bf16.mxu0 0
        %961 = vmatpush1.bf16.msra.mxu0 %v845
        %962 = vmatprep.subr.bf16.mxu0 0
        %963 = vmatpush1.bf16.msra.mxu0 %v844
        %964 = vmatprep.subr.bf16.mxu0 0
        %965 = vmatpush1.bf16.msra.mxu0 %v843
        %966 = vmatprep.subr.bf16.mxu0 0
        %967 = vmatpush1.bf16.msra.mxu0 %v842
        %968 = vmatprep.subr.bf16.mxu0 0
        %969 = vmatpush1.bf16.msra.mxu0 %v841
        %970 = vmatprep.subr.bf16.mxu0 0
        %971 = vmatpush1.bf16.msra.mxu0 %v840
        %972 = vmatprep.subr.bf16.mxu0 0
        %973 = vmatpush1.bf16.msra.mxu0 %v839
        %974 = vmatprep.subr.bf16.mxu0 0
        %975 = vmatpush1.bf16.msra.mxu0 %v838
        %976 = vmatprep.subr.bf16.mxu0 0
        %977 = vmatpush2.bf16.msra.mxu0 %v853
        %978 = vmatprep.subr.bf16.mxu0 0
        %979 = vmatpush2.bf16.msra.mxu0 %v852
        %980 = vmatprep.subr.bf16.mxu0 0
        %981 = vmatpush2.bf16.msra.mxu0 %v851
        %982 = vmatprep.subr.bf16.mxu0 0
        %983 = vmatpush2.bf16.msra.mxu0 %v850
        %984 = vmatprep.subr.bf16.mxu0 0
        %985 = vmatpush2.bf16.msra.mxu0 %v849
        %986 = vmatprep.subr.bf16.mxu0 0
        %987 = vmatpush2.bf16.msra.mxu0 %v848
        %988 = vmatprep.subr.bf16.mxu0 0
        %989 = vmatpush2.bf16.msra.mxu0 %v847
        %990 = vmatprep.subr.bf16.mxu0 0
        %991 = vmatpush2.bf16.msra.mxu0 %v846
        %992 = vmatprep.mubr.bf16.mxu0 %v639
        %993 = vmatmul.mubr.bf16.gmra.mxu0 %v638
        %v994 = vpop.f32.mrf.mxu0
        %v995 = vadd.f32 %v946, %v994
        %v996 = vpop.f32.mrf.mxu0
        %v997 = vpop.f32.mrf.mxu0
        %v998 = vadd.f32 %v949, %v997
        %v999 = vpop.f32.mrf.mxu0
        %1000 = vmatprep.mubr.bf16.mxu0 %v645
        %1001 = vmatmul.mubr.bf16.gmra.mxu0 %v644
        %v1002 = vpop.f32.mrf.mxu0
        %v1003 = vadd.f32 %v954, %v1002
        %v1004 = vpop.f32.mrf.mxu0
        %v1005 = vpop.f32.mrf.mxu0
        %v1006 = vadd.f32 %v957, %v1005
        %v1007 = vpop.f32.mrf.mxu0
        %1008 = vdwg.mxu0
        %1009 = vmatprep.subr.bf16.mxu0 0
        %1010 = vmatpush1.bf16.msra.mxu0 %v861
        %1011 = vmatprep.subr.bf16.mxu0 0
        %1012 = vmatpush1.bf16.msra.mxu0 %v860
        %1013 = vmatprep.subr.bf16.mxu0 0
        %1014 = vmatpush1.bf16.msra.mxu0 %v859
        %1015 = vmatprep.subr.bf16.mxu0 0
        %1016 = vmatpush1.bf16.msra.mxu0 %v858
        %1017 = vmatprep.subr.bf16.mxu0 0
        %1018 = vmatpush1.bf16.msra.mxu0 %v857
        %1019 = vmatprep.subr.bf16.mxu0 0
        %1020 = vmatpush1.bf16.msra.mxu0 %v856
        %1021 = vmatprep.subr.bf16.mxu0 0
        %1022 = vmatpush1.bf16.msra.mxu0 %v855
        %1023 = vmatprep.subr.bf16.mxu0 0
        %1024 = vmatpush1.bf16.msra.mxu0 %v854
        %1025 = vmatprep.subr.bf16.mxu0 0
        %1026 = vmatpush2.bf16.msra.mxu0 0
        %1027 = vmatprep.subr.bf16.mxu0 0
        %1028 = vmatpush2.bf16.msra.mxu0 0
        %1029 = vmatprep.subr.bf16.mxu0 0
        %1030 = vmatpush2.bf16.msra.mxu0 0
        %1031 = vmatprep.subr.bf16.mxu0 0
        %1032 = vmatpush2.bf16.msra.mxu0 0
        %1033 = vmatprep.subr.bf16.mxu0 0
        %1034 = vmatpush2.bf16.msra.mxu0 0
        %1035 = vmatprep.subr.bf16.mxu0 0
        %1036 = vmatpush2.bf16.msra.mxu0 0
        %1037 = vmatprep.subr.bf16.mxu0 0
        %1038 = vmatpush2.bf16.msra.mxu0 0
        %1039 = vmatprep.subr.bf16.mxu0 0
        %1040 = vmatpush2.bf16.msra.mxu0 %v862
        %1041 = vmatprep.mubr.bf16.mxu0 %v906
        %1042 = vmatmul.mubr.bf16.gmra.mxu0 %v640
        %v1043 = vpop.f32.mrf.mxu0
        %v1044 = vadd.f32 %v995, %v1043
        %v1045 = vpop.f32.mrf.mxu0
        %v1046 = vpop.f32.mrf.mxu0
        %v1047 = vadd.f32 %v998, %v1046
        %v1048 = vpop.f32.mrf.mxu0
        %1049 = vmatprep.mubr.bf16.mxu0 %v909
        %1050 = vmatmul.mubr.bf16.gmra.mxu0 %v646
        %v1051 = vpop.f32.mrf.mxu0
        %v1052 = vadd.f32 %v1003, %v1051
        %v1053 = vpop.f32.mrf.mxu0
        %v1054 = vpop.f32.mrf.mxu0
        %v1055 = vadd.f32 %v1006, %v1054
        %v1056 = vpop.f32.mrf.mxu0
        %1057 = vdwg.mxu0
        %1058 = vst [vmem:[%s504] sm:$0xff] %v1044
        %v1059 = vmul.f32 %v1044, %v1044
        %1060 = vst [vmem:[%s504 + $0x8] sm:$0xff] %v1047
        %v1061 = vmul.f32 %v1047, %v1047
        %v1062 = vadd.f32 %v1059, %v1061
        %1063 = vst [vmem:[%s504 + $0x10] sm:$0xff] %v1052
        %v1064 = vmul.f32 %v1052, %v1052
        %v1065 = vadd.f32 %v1062, %v1064
        %1066 = vst [vmem:[%s504 + $0x18] sm:$0xff] %v1055
        %v1067 = vmul.f32 %v1055, %v1055
        %v1068 = vadd.f32 %v1065, %v1067
        %v1069 = vadd.f32 %v1068, 1.0
        %v1070 = vmul.f32 %v1068, %v1069
        %v1071 = vmul.f32 %v1070, %v1069
        %v1072 = vrsqrt.pop %v1071
        %v1073 = vmul.f32 %v1068, %v1072
        %v1074 = vld [vmem:[%s504] sm:$0xff]
        %v1075 = vmul.f32 %v1074, %v1073
        %1076 = vst [vmem:[%s504] sm:$0xff] %v1075
        %v1077 = vld [vmem:[%s504 + $0x8] sm:$0xff]
        %v1078 = vmul.f32 %v1077, %v1073
        %1079 = vst [vmem:[%s504 + $0x8] sm:$0xff] %v1078
        %v1080 = vld [vmem:[%s504 + $0x10] sm:$0xff]
        %v1081 = vmul.f32 %v1080, %v1073
        %1082 = vst [vmem:[%s504 + $0x10] sm:$0xff] %v1081
        %v1083 = vld [vmem:[%s504 + $0x18] sm:$0xff]
        %v1084 = vmul.f32 %v1083, %v1073
        %1085 = vst [vmem:[%s504 + $0x18] sm:$0xff] %v1084
        %s1086 = sand.u32 %s68, 1
        %s1087 = sand.u32 %s68, 1
        %s1088 = smul.addr %s1087, 32
        %s1089 = scalar_lea.vmem [#allocation3], %s1088
        // Predicated region
        $region70: #{primary_caps_forward.1} parent=64 // pred_check
          %p1090 = pneg %p78
        $region71: #{primary_caps_forward.1} parent=64 // pred_check_branch
          %1092 = sbr.rel (%p1090) target = $region73
        $region72: #{primary_caps_forward.1} parent=64 // pred_region
          %s1093 = smul.addr %s13, 8
          %s1094 = scalar_lea.vmem %s2, %s1093
          // Predicated region
          $region74: #{primary_caps_forward.1} parent=72 // pred_check
            _
          $region75: #{primary_caps_forward.1} parent=72 // pred_check_branch
            %1096 = sbr.rel (0) target = $region77
          $region76: #{primary_caps_forward.1} parent=72 // pred_region
            // Predicated region
            $region78: #{primary_caps_forward.1} parent=76 // pred_check
              _
            $region79: #{primary_caps_forward.1} parent=76 // pred_check_branch
              %1098 = sbr.rel (0) target = $region81
            $region80: #{primary_caps_forward.1} parent=76 // pred_region
              // Predicated region
              $region93: #{primary_caps_forward.1} parent=80 // pred_check
                _
              $region94: #{primary_caps_forward.1} parent=80 // pred_check_branch
                %1120 = sbr.rel (0) target = $region96
              $region95: #{primary_caps_forward.1} parent=80 // pred_region
                loop: start=0, step=1, limit=1
                $region97: #{primary_caps_forward.1} parent=95 // loop_pre_header
                  _
                $region98: #{primary_caps_forward.1} parent=95 // loop_header
                  %s1122 = sphi 0, %s1126
                  %p1123 = scmp.ge.s32.totalorder %s1122, 1
                  %s1127 = sphi %s1089, %s1089
                  %s1128 = sphi %s1094, %s1094
                $region99: #{primary_caps_forward.1} parent=95 // loop_header_branch
                  %1125 = sbr.rel (%p1123) target = $region103
                $region100: #{primary_caps_forward.1} parent=95 // loop_body
                  %v1129 = vld [vmem:[%s1127] sm:$0xff]
                  %1130 = vst [vmem:[%s1128] sm:$0xff] %v1129
                  %v1131 = vld [vmem:[%s1127 + $0x8] sm:$0xff]
                  %1132 = vst [vmem:[%s1128 + $0x10] sm:$0xff] %v1131
                  %v1133 = vld [vmem:[%s1127 + $0x10] sm:$0xff]
                  %1134 = vst [vmem:[%s1128 + $0x20] sm:$0xff] %v1133
                  %v1135 = vld [vmem:[%s1127 + $0x18] sm:$0xff]
                  %1136 = vst [vmem:[%s1128 + $0x30] sm:$0xff] %v1135
                $region101: #{primary_caps_forward.1} parent=95 // loop_footer
                  %s1126 = sadd.s32 1, %s1122
                $region102: #{primary_caps_forward.1} parent=95 // loop_footer_branch
                  %1121 = sbr.rel target = $region98
                $region103: #{primary_caps_forward.1} parent=95 // loop_exit
                  _
              $region96: #{primary_caps_forward.1} parent=80 // pred_fallthru
                _
              // Predicated region
              $region104: #{primary_caps_forward.1} parent=80 // pred_check
                _
              $region105: #{primary_caps_forward.1} parent=80 // pred_check_branch
                %1138 = sbr.rel target = $region107
              $region106: #{primary_caps_forward.1} parent=80 // pred_region
                _
              $region107: #{primary_caps_forward.1} parent=80 // pred_fallthru
                _
            $region81: #{primary_caps_forward.1} parent=76 // pred_fallthru
              _
            // Predicated region
            $region82: #{primary_caps_forward.1} parent=76 // pred_check
              _
            $region83: #{primary_caps_forward.1} parent=76 // pred_check_branch
              %1100 = sbr.rel target = $region85
            $region84: #{primary_caps_forward.1} parent=76 // pred_region
              %s1102 = ssub.s32 256, 1
              loop: start=0, step=1, limit=1
              $region86: #{primary_caps_forward.1} parent=84 // loop_pre_header
                _
              $region87: #{primary_caps_forward.1} parent=84 // loop_header
                %s1104 = sphi 0, %s1108
                %p1105 = scmp.ge.s32.totalorder %s1104, 1
                %s1109 = sphi %s1089, %s1089
                %s1110 = sphi %s1094, %s1094
              $region88: #{primary_caps_forward.1} parent=84 // loop_header_branch
                %1107 = sbr.rel (%p1105) target = $region92
              $region89: #{primary_caps_forward.1} parent=84 // loop_body
                %v1111 = vld [vmem:[%s1109] sm:%s1102]
                %1112 = vst [vmem:[%s1110] sm:%s1102] %v1111
                %v1113 = vld [vmem:[%s1109 + $0x8] sm:%s1102]
                %1114 = vst [vmem:[%s1110 + $0x10] sm:%s1102] %v1113
                %v1115 = vld [vmem:[%s1109 + $0x10] sm:%s1102]
                %1116 = vst [vmem:[%s1110 + $0x20] sm:%s1102] %v1115
                %v1117 = vld [vmem:[%s1109 + $0x18] sm:%s1102]
                %1118 = vst [vmem:[%s1110 + $0x30] sm:%s1102] %v1117
              $region90: #{primary_caps_forward.1} parent=84 // loop_footer
                %s1108 = sadd.s32 1, %s1104
              $region91: #{primary_caps_forward.1} parent=84 // loop_footer_branch
                %1103 = sbr.rel target = $region87
              $region92: #{primary_caps_forward.1} parent=84 // loop_exit
                _
            $region85: #{primary_caps_forward.1} parent=76 // pred_fallthru
              _
          $region77: #{primary_caps_forward.1} parent=72 // pred_fallthru
            _
          %1139 = vnop
        $region73: #{primary_caps_forward.1} parent=64 // pred_fallthru
          _
      $region65: #{primary_caps_forward.1} parent=5 // pred_fallthru
        _
      %p1140 = scmp.le.s32.totalorder 2, %s8
      // Predicated region
      $region108: #{primary_caps_forward.1} parent=5 // pred_check
        %p1141 = pneg %p1140
      $region109: #{primary_caps_forward.1} parent=5 // pred_check_branch
        %1143 = sbr.rel (%p1141) target = $region111
      $region110: #{primary_caps_forward.1} parent=5 // pred_region
        %s1144 = ssub.s32 %s8, 2
        // Predicated region
        $region112: #{primary_caps_forward.1} parent=110 // pred_check
          %p1145 = pneg %p84
        $region113: #{primary_caps_forward.1} parent=110 // pred_check_branch
          %1147 = sbr.rel (%p1145) target = $region115
        $region114: #{primary_caps_forward.1} parent=110 // pred_region
          %s1148 = sand.u32 %s69, 1
          %s1149 = sand.u32 %s69, 1
          %s1150 = smul.addr %s1149, 32
          %s1151 = scalar_lea.vmem [#allocation3], %s1150
        $region115: #{primary_caps_forward.1} parent=110 // pred_fallthru
          _
      $region111: #{primary_caps_forward.1} parent=5 // pred_fallthru
        _
    $region6: #{primary_caps_forward.1} parent=1 // loop_footer
      %s12 = sadd.s32 1, %s8
    $region7: #{primary_caps_forward.1} parent=1 // loop_footer_branch
      %7 = sbr.rel target = $region3
    $region8: #{primary_caps_forward.1} parent=1 // loop_exit
      _

</llo_original>
